<compile_context>
chip_gen: v7x
topology: tpu7x:2x2x1
jax: 0.10.0
libtpu: 0.0.40
codegen_flags: <defaults>
</compile_context>

<pallas_src>
import functools

import jax
import jax.numpy as jnp
from jax.experimental import pallas as pl
from jax.experimental.pallas import tpu as pltpu

W_BIT = 8
BN_EPS = 1e-5

B_MAX = 8            # max samples folded into one grid step
TM_LANE_CAP = 2048   # max lanes per M tile (before VMEM budgeting)


def _round_up(x, m):
    return (x + m - 1) // m * m


def _cdiv(a, b):
    return -(-a // b)


# ---------------------------------------------------------------------------
# Parameter prep (glue, plain JAX): DoReFa 8-bit weight quantization
# ---------------------------------------------------------------------------
def quantize_weight(w, w_bit=W_BIT):
    """weight_quantize_fn from DoReFa (w_bit not in {1, 32} path)."""
    n = float(2 ** w_bit - 1)
    wt = jnp.tanh(w)
    # NOTE: matches the PyTorch op exactly; an all-zero weight tensor yields NaN there too.
    wt = wt / (2.0 * jnp.max(jnp.abs(wt))) + 0.5
    return 2.0 * (jnp.round(wt * n) / n) - 1.0


# ---------------------------------------------------------------------------
# Pallas kernels
# ---------------------------------------------------------------------------
def _stats_kernel(x_ref, w_ref, sum_ref, sumsq_ref):
    # x_ref: (B_TILE, K, TM)   w_ref: (Co_p, K)   sum/sumsq: (1, Co_p, 1)
    # Partial BN stats accumulated in the VMEM-resident output block across the
    # trailing ('arbitrary') M-tile axis -> one HBM writeback per batch tile.
    @pl.when(pl.program_id(1) == 0)
    def _():
        sum_ref[...] = jnp.zeros_like(sum_ref)
        sumsq_ref[...] = jnp.zeros_like(sumsq_ref)

    acc_s = None
    acc_q = None
    for b in range(x_ref.shape[0]):          # static unroll, B_TILE <= 8
        y = jnp.dot(w_ref[...], x_ref[b], preferred_element_type=jnp.float32)  # (Co_p, TM)
        s = jnp.sum(y, axis=1, keepdims=True)          # lane-axis reduce (XLU)
        q = jnp.sum(y * y, axis=1, keepdims=True)
        acc_s = s if acc_s is None else acc_s + s
        acc_q = q if acc_q is None else acc_q + q
    sum_ref[0] += acc_s
    sumsq_ref[0] += acc_q


def _norm_kernel(x_ref, w_ref, scale_ref, shift_ref, o_ref):
    # x_ref: (B_TILE, K, TM)  w_ref: (Co_p, K)  scale/shift: (Co_p, 1)
    # o_ref: (B_TILE, Co_p, TM).  Recompute the cheap matmul, apply folded BN (one FMA).
    for b in range(x_ref.shape[0]):
        y = jnp.dot(w_ref[...], x_ref[b], preferred_element_type=jnp.float32)  # (Co_p, TM)
        o_ref[b] = (y * scale_ref[...] + shift_ref[...]).astype(o_ref.dtype)


# ---------------------------------------------------------------------------
# Layout helpers
# ---------------------------------------------------------------------------
def _to_km_layout(x, kh, kw, stride, padding):
    """NCHW -> (N, K, Ho*Wo) with K = Ci*KH*KW and the spatial (M) axis last."""
    n, ci, h, w = x.shape
    if kh == 1 and kw == 1 and stride == 1 and padding == 0:
        # 1x1 fast path: no im2col, no transpose — NCHW is already (Ci, H*W) per sample.
        return x.reshape(n, ci, h * w), (n, h, w)
    # TODO(synk): move patch extraction into the kernel (halo'd DMA slab + shifted
    # pl.ds slices) to avoid this KH*KW-inflated HBM buffer for non-1x1 kernels.
    if padding > 0:
        x = jnp.pad(x, ((0, 0), (0, 0), (padding, padding), (padding, padding)))
    hp, wp = h + 2 * padding, w + 2 * padding
    ho = (hp - kh) // stride + 1
    wo = (wp - kw) // stride + 1
    patches = []
    for i in range(kh):
        for j in range(kw):
            patches.append(x[:, :, i:i + ho * stride:stride, j:j + wo * stride:stride])
    p = jnp.stack(patches, axis=0)                       # (KH*KW, N, Ci, Ho, Wo)
    p = jnp.transpose(p, (1, 2, 0, 3, 4))                # (N, Ci, KH*KW, Ho, Wo)
    return p.reshape(n, ci * kh * kw, ho * wo), (n, ho, wo)


def _vmem_capacity_bytes():
    try:
        cap = getattr(pltpu.get_tpu_info(), "vmem_capacity_bytes", None)
        if cap:
            return int(cap)
    except Exception:
        pass
    return 128 << 20


# ---------------------------------------------------------------------------
# Forward
# ---------------------------------------------------------------------------
@functools.partial(jax.jit, static_argnames=("stride", "padding"))
def conv_bn_forward(x, weight, gamma, beta, *, stride=1, padding=0):
    """x: (N, Ci, H, W) NCHW. weight: (Co, Ci, KH, KW). Returns (N, Co, Ho, Wo)."""
    co, ci, kh, kw = weight.shape
    # TODO(synk): groups > 1 / dilation not implemented; module default is groups=1.
    wq = quantize_weight(weight).astype(jnp.float32)          # (Co, Ci, KH, KW)
    w_mat = wq.reshape(co, ci * kh * kw)                      # (Co, K): Y = W @ X

    x_km, (n, ho, wo) = _to_km_layout(x.astype(jnp.float32), kh, kw, stride, padding)
    k = x_km.shape[1]
    hw = ho * wo
    m_real = n * hw                                           # BN reduction count

    co_p = _round_up(co, 8)
    hw_128 = _round_up(hw, 128)

    # --- generation-aware VMEM budgets (v7x: 64 MiB physical; v5e/v6e: 128 MiB) ---
    vmem_cap = _vmem_capacity_bytes()
    work_budget = min(vmem_cap * 3 // 4, 96 << 20)

    # --- batch tile: amortize ~0.35us/step grid overhead on small images, but keep
    #     >=2 parallel grid steps when possible so v7x's 2 TensorCores both get work ---
    mt0 = _cdiv(hw, min(TM_LANE_CAP, hw_128))
    if mt0 == 1 and n >= 2:
        b_tile = max(1, min(B_MAX, n // 2))
    else:
        b_tile = min(n, B_MAX)

    # --- M tile: biggest that fits the budget (honest byte accounting), then shrunk
    #     to minimize last-tile padding: tm ~= round_up(cdiv(hw, n_tiles), 128) ---
    fixed_bytes = 8 * co_p * k + 64 * co_p + (2 << 20)        # resident W (x2 buf) + BN vecs + slop
    per_lane_bytes = 8 * b_tile * (k + co_p)                  # double-buffered X + out per lane (f32)
    tm_budget = max(128, (work_budget - fixed_bytes) // per_lane_bytes // 128 * 128)
    # TODO(synk): if Co_p*K alone overflows the budget (huge Co*K on v7x), add a trailing
    # 'arbitrary' K grid axis with a VMEM f32 accumulator instead of keeping W resident.
    tm_cap = min(TM_LANE_CAP, tm_budget, hw_128)
    mt = _cdiv(hw, tm_cap)
    tm = min(_round_up(_cdiv(hw, mt), 128), tm_cap)
    hw_p = mt * tm

    nb = _cdiv(n, b_tile)
    n_p = nb * b_tile

    if hw_p != hw or n_p != n:
        # Zero padding contributes 0 to sum / sum-of-squares (conv has no bias);
        # padded rows/columns are sliced away below.
        x_km = jnp.pad(x_km, ((0, n_p - n), (0, 0), (0, hw_p - hw)))
    if co_p != co:
        w_mat = jnp.pad(w_mat, ((0, co_p - co), (0, 0)))

    needed = fixed_bytes + per_lane_bytes * tm + (2 << 20)
    vmem_limit = int(min(max(needed, 16 << 20), min(vmem_cap * 7 // 8, 100 << 20)))

    grid = (nb, mt)
    x_spec = pl.BlockSpec((b_tile, k, tm), lambda b, i: (b, 0, i))
    w_spec = pl.BlockSpec((co_p, k), lambda b, i: (0, 0))

    # ---- pass 1: per-batch-tile BN statistics (accumulated across the M axis) ----
    part_sum, part_sq = pl.pallas_call(
        _stats_kernel,
        out_shape=(jax.ShapeDtypeStruct((nb, co_p, 1), jnp.float32),
                   jax.ShapeDtypeStruct((nb, co_p, 1), jnp.float32)),
        grid=grid,
        in_specs=[x_spec, w_spec],
        out_specs=(pl.BlockSpec((1, co_p, 1), lambda b, i: (b, 0, 0)),
                   pl.BlockSpec((1, co_p, 1), lambda b, i: (b, 0, 0))),
        compiler_params=pltpu.CompilerParams(
            dimension_semantics=("parallel", "arbitrary"),
            vmem_limit_bytes=vmem_limit),
    )(x_km, w_mat)

    # ---- tiny JAX-side combine + fold BN into per-channel scale / shift ----
    s1 = jnp.sum(part_sum, axis=(0, 2))                       # (Co_p,)
    s2 = jnp.sum(part_sq, axis=(0, 2))                        # (Co_p,)
    mean = s1 / m_real
    # NOTE: E[y^2]-E[y]^2 in f32 is fine at 1e-4 for these shapes.
    # TODO(synk): Welford-style (count, mean, M2) combine for very large N*H*W.
    var = jnp.maximum(s2 / m_real - mean * mean, 0.0)         # biased variance
    inv_std = jax.lax.rsqrt(var + BN_EPS)
    gamma_p = jnp.pad(gamma.astype(jnp.float32), (0, co_p - co), constant_values=1.0)
    beta_p = jnp.pad(beta.astype(jnp.float32), (0, co_p - co))
    scale = (gamma_p * inv_std).reshape(co_p, 1)
    shift = (beta_p - mean * gamma_p * inv_std).reshape(co_p, 1)

    # ---- pass 2: recompute the cheap matmul (K < 2*Co here) + folded BN affine ----
    # TODO(synk): when K > 2*Co (3x3 im2col path), write Y once in pass 1 and run a
    # normalize-only pass here instead (fewer HBM bytes, biggest win on v5e).
    out = pl.pallas_call(
        _norm_kernel,
        out_shape=jax.ShapeDtypeStruct((n_p, co_p, hw_p), jnp.float32),
        grid=grid,
        in_specs=[x_spec, w_spec,
                  pl.BlockSpec((co_p, 1), lambda b, i: (0, 0)),
                  pl.BlockSpec((co_p, 1), lambda b, i: (0, 0))],
        out_specs=pl.BlockSpec((b_tile, co_p, tm), lambda b, i: (b, 0, i)),
        compiler_params=pltpu.CompilerParams(
            dimension_semantics=("parallel", "parallel"),
            vmem_limit_bytes=vmem_limit),
    )(x_km, w_mat, scale, shift)

    # (N_p, Co_p, HW_p) -> NCHW; padded batch / channels / columns sliced away.
    return out[:n, :co, :hw].reshape(n, co, ho, wo)


# ---------------------------------------------------------------------------
# Pure-JAX reference for sanity checking
# ---------------------------------------------------------------------------
def conv_bn_reference(x, weight, gamma, beta, *, stride=1, padding=0):
    wq = quantize_weight(weight)
    y = jax.lax.conv_general_dilated(
        x.astype(jnp.float32), wq.astype(jnp.float32),
        window_strides=(stride, stride),
        padding=[(padding, padding), (padding, padding)],
        dimension_numbers=("NCHW", "OIHW", "NCHW"))
    mean = jnp.mean(y, axis=(0, 2, 3), keepdims=True)
    var = jnp.mean((y - mean) ** 2, axis=(0, 2, 3), keepdims=True)
    g = gamma.reshape(1, -1, 1, 1)
    b = beta.reshape(1, -1, 1, 1)
    return (y - mean) * jax.lax.rsqrt(var + BN_EPS) * g + b


if __name__ == "__main__":
    key = jax.random.PRNGKey(0)
    k_x, k_w = jax.random.split(key)

    N, IN_C, OUT_C, H, W = 2, 4, 8, 16, 16
    KH, KW = 1, 1          # module defaults: kernel=(1,1), stride=1, padding=0

    x = jax.random.normal(k_x, (N, IN_C, H, W), dtype=jnp.float32)
    weight = 0.1 * jax.random.normal(k_w, (OUT_C, IN_C, KH, KW), dtype=jnp.float32)
    gamma = jnp.ones((OUT_C,), dtype=jnp.float32)   # BatchNorm2d init
    beta = jnp.zeros((OUT_C,), dtype=jnp.float32)

    out = conv_bn_forward(x, weight, gamma, beta, stride=1, padding=0)
    out = jax.block_until_ready(out)

    ref = conv_bn_reference(x, weight, gamma, beta, stride=1, padding=0)
    assert out.shape == (N, OUT_C, H, W), out.shape
    assert jnp.allclose(out, ref, atol=1e-4, rtol=1e-4), float(
        jnp.max(jnp.abs(out - ref)))

    print("KERNEL_OK")
</pallas_src>

<mosaic_0001>
module attributes {stable_mosaic.version = 11 : i64} {
  func.func @_stats_kernel(%arg0: i32, %arg1: i32, %arg2: memref<1x4x256xf32, #tpu.memory_space<vmem>>, %arg3: memref<8x4xf32, #tpu.memory_space<vmem>>, %arg4: memref<1x8x1xf32, #tpu.memory_space<vmem>>, %arg5: memref<1x8x1xf32, #tpu.memory_space<vmem>>) attributes {dimension_semantics = [#tpu.dimension_semantics<parallel>, #tpu.dimension_semantics<arbitrary>], iteration_bounds = array<i64: 2, 1>, scalar_prefetch = 0 : i64, scratch_operands = 0 : i64, tpu.core_type = #tpu.core_type<tc>, window_params = [{transform_indices = @transform_0, window_bounds = array<i64: 1, 4, 256>}, {pipeline_mode = #tpu.pipeline_mode<synchronous>, transform_indices = @transform_1, window_bounds = array<i64: 8, 4>}, {transform_indices = @transform_2, window_bounds = array<i64: 1, 8, 1>}, {transform_indices = @transform_3, window_bounds = array<i64: 1, 8, 1>}]} {
    %c0_i32 = arith.constant 0 : i32
    %0 = arith.cmpi eq, %arg1, %c0_i32 : i32
    %1 = arith.extui %0 : i1 to i32
    %c0_i32_0 = arith.constant 0 : i32
    %2 = arith.cmpi ne, %1, %c0_i32_0 : i32
    scf.if %2 {
      %cst_19 = arith.constant 0.000000e+00 : f32
      %24 = vector.broadcast %cst_19 : f32 to vector<1x8x1xf32>
      %c0_20 = arith.constant 0 : index
      %c0_21 = arith.constant 0 : index
      %c0_22 = arith.constant 0 : index
      %25 = vector.load %arg4[%c0_20, %c0_21, %c0_22] : memref<1x8x1xf32, #tpu.memory_space<vmem>>, vector<1x8x1xf32>
      tpu.vector_store %arg4[%c0_20, %c0_21, %c0_22], %24 {strides = array<i32>} : memref<1x8x1xf32, #tpu.memory_space<vmem>>, vector<1x8x1xf32>,
      %cst_23 = arith.constant 0.000000e+00 : f32
      %26 = vector.broadcast %cst_23 : f32 to vector<1x8x1xf32>
      %c0_24 = arith.constant 0 : index
      %c0_25 = arith.constant 0 : index
      %c0_26 = arith.constant 0 : index
      %27 = vector.load %arg5[%c0_24, %c0_25, %c0_26] : memref<1x8x1xf32, #tpu.memory_space<vmem>>, vector<1x8x1xf32>
      tpu.vector_store %arg5[%c0_24, %c0_25, %c0_26], %26 {strides = array<i32>} : memref<1x8x1xf32, #tpu.memory_space<vmem>>, vector<1x8x1xf32>,
    } else {
    }
    %c0 = arith.constant 0 : index
    %c0_1 = arith.constant 0 : index
    %3 = vector.load %arg3[%c0, %c0_1] : memref<8x4xf32, #tpu.memory_space<vmem>>, vector<8x4xf32>
    %c0_2 = arith.constant 0 : index
    %c0_3 = arith.constant 0 : index
    %c0_4 = arith.constant 0 : index
    %4 = vector.load %arg2[%c0_2, %c0_3, %c0_4] : memref<1x4x256xf32, #tpu.memory_space<vmem>>, vector<1x4x256xf32>
    %5 = vector.shape_cast %4 : vector<1x4x256xf32> to vector<4x256xf32>
    %cst = arith.constant dense<0.000000e+00> : vector<8x256xf32>
    %6 = tpu.matmul %3, %5, %cst {dimension_numbers = #tpu.dot_dimension_numbers<[1], [0], [0], [1], [0, 0, 1, 1], [], []>} : vector<8x4xf32>, vector<4x256xf32>, vector<8x256xf32> -> vector<8x256xf32>
    %cst_5 = arith.constant dense<0.000000e+00> : vector<8xf32>
    %7 = vector.multi_reduction <add>, %6, %cst_5 [1] : vector<8x256xf32> to vector<8xf32>
    %8 = vector.shape_cast %7 : vector<8xf32> to vector<8x1xf32>
    %9 = arith.mulf %6, %6 : vector<8x256xf32>
    %cst_6 = arith.constant dense<0.000000e+00> : vector<8xf32>
    %10 = vector.multi_reduction <add>, %9, %cst_6 [1] : vector<8x256xf32> to vector<8xf32>
    %11 = vector.shape_cast %10 : vector<8xf32> to vector<8x1xf32>
    %c0_7 = arith.constant 0 : index
    %c0_8 = arith.constant 0 : index
    %c0_9 = arith.constant 0 : index
    %12 = vector.load %arg4[%c0_7, %c0_8, %c0_9] : memref<1x8x1xf32, #tpu.memory_space<vmem>>, vector<1x8x1xf32>
    %13 = vector.shape_cast %12 : vector<1x8x1xf32> to vector<8x1xf32>
    %14 = arith.addf %13, %8 : vector<8x1xf32>
    %c0_10 = arith.constant 0 : index
    %c0_11 = arith.constant 0 : index
    %c0_12 = arith.constant 0 : index
    %15 = vector.load %arg4[%c0_10, %c0_11, %c0_12] : memref<1x8x1xf32, #tpu.memory_space<vmem>>, vector<1x8x1xf32>
    %16 = vector.shape_cast %15 : vector<1x8x1xf32> to vector<8x1xf32>
    %17 = vector.shape_cast %14 : vector<8x1xf32> to vector<1x8x1xf32>
    tpu.vector_store %arg4[%c0_10, %c0_11, %c0_12], %17 {strides = array<i32>} : memref<1x8x1xf32, #tpu.memory_space<vmem>>, vector<1x8x1xf32>,
    %c0_13 = arith.constant 0 : index
    %c0_14 = arith.constant 0 : index
    %c0_15 = arith.constant 0 : index
    %18 = vector.load %arg5[%c0_13, %c0_14, %c0_15] : memref<1x8x1xf32, #tpu.memory_space<vmem>>, vector<1x8x1xf32>
    %19 = vector.shape_cast %18 : vector<1x8x1xf32> to vector<8x1xf32>
    %20 = arith.addf %19, %11 : vector<8x1xf32>
    %c0_16 = arith.constant 0 : index
    %c0_17 = arith.constant 0 : index
    %c0_18 = arith.constant 0 : index
    %21 = vector.load %arg5[%c0_16, %c0_17, %c0_18] : memref<1x8x1xf32, #tpu.memory_space<vmem>>, vector<1x8x1xf32>
    %22 = vector.shape_cast %21 : vector<1x8x1xf32> to vector<8x1xf32>
    %23 = vector.shape_cast %20 : vector<8x1xf32> to vector<1x8x1xf32>
    tpu.vector_store %arg5[%c0_16, %c0_17, %c0_18], %23 {strides = array<i32>} : memref<1x8x1xf32, #tpu.memory_space<vmem>>, vector<1x8x1xf32>,
    return
  }
  func.func @transform_0(%arg0: i32, %arg1: i32) -> (i32, i32, i32) {
    %c0_i32 = arith.constant 0 : i32
    %c0_i32_0 = arith.constant 0 : i32
    return %arg0, %c0_i32, %arg1 : i32, i32, i32
  }
  func.func @transform_1(%arg0: i32, %arg1: i32) -> (i32, i32) {
    %c0_i32 = arith.constant 0 : i32
    %c0_i32_0 = arith.constant 0 : i32
    %c0_i32_1 = arith.constant 0 : i32
    return %c0_i32, %c0_i32_0 : i32, i32
  }
  func.func @transform_2(%arg0: i32, %arg1: i32) -> (i32, i32, i32) {
    %c0_i32 = arith.constant 0 : i32
    %c0_i32_0 = arith.constant 0 : i32
    %c0_i32_1 = arith.constant 0 : i32
    return %arg0, %c0_i32, %c0_i32_0 : i32, i32, i32
  }
  func.func @transform_3(%arg0: i32, %arg1: i32) -> (i32, i32, i32) {
    %c0_i32 = arith.constant 0 : i32
    %c0_i32_0 = arith.constant 0 : i32
    %c0_i32_1 = arith.constant 0 : i32
    return %arg0, %c0_i32, %c0_i32_0 : i32, i32, i32
  }
}

module attributes {stable_mosaic.version = 11 : i64} {
  func.func @_norm_kernel(%arg0: i32, %arg1: i32, %arg2: memref<1x4x256xf32, #tpu.memory_space<vmem>>, %arg3: memref<8x4xf32, #tpu.memory_space<vmem>>, %arg4: memref<8x1xf32, #tpu.memory_space<vmem>>, %arg5: memref<8x1xf32, #tpu.memory_space<vmem>>, %arg6: memref<1x8x256xf32, #tpu.memory_space<vmem>>) attributes {dimension_semantics = [#tpu.dimension_semantics<parallel>, #tpu.dimension_semantics<parallel>], iteration_bounds = array<i64: 2, 1>, scalar_prefetch = 0 : i64, scratch_operands = 0 : i64, tpu.core_type = #tpu.core_type<tc>, window_params = [{transform_indices = @transform_0, window_bounds = array<i64: 1, 4, 256>}, {pipeline_mode = #tpu.pipeline_mode<synchronous>, transform_indices = @transform_1, window_bounds = array<i64: 8, 4>}, {pipeline_mode = #tpu.pipeline_mode<synchronous>, transform_indices = @transform_2, window_bounds = array<i64: 8, 1>}, {pipeline_mode = #tpu.pipeline_mode<synchronous>, transform_indices = @transform_3, window_bounds = array<i64: 8, 1>}, {transform_indices = @transform_4, window_bounds = array<i64: 1, 8, 256>}]} {
    %c0 = arith.constant 0 : index
    %c0_0 = arith.constant 0 : index
    %0 = vector.load %arg3[%c0, %c0_0] : memref<8x4xf32, #tpu.memory_space<vmem>>, vector<8x4xf32>
    %c0_1 = arith.constant 0 : index
    %c0_2 = arith.constant 0 : index
    %c0_3 = arith.constant 0 : index
    %1 = vector.load %arg2[%c0_1, %c0_2, %c0_3] : memref<1x4x256xf32, #tpu.memory_space<vmem>>, vector<1x4x256xf32>
    %2 = vector.shape_cast %1 : vector<1x4x256xf32> to vector<4x256xf32>
    %cst = arith.constant dense<0.000000e+00> : vector<8x256xf32>
    %3 = tpu.matmul %0, %2, %cst {dimension_numbers = #tpu.dot_dimension_numbers<[1], [0], [0], [1], [0, 0, 1, 1], [], []>} : vector<8x4xf32>, vector<4x256xf32>, vector<8x256xf32> -> vector<8x256xf32>
    %c0_4 = arith.constant 0 : index
    %c0_5 = arith.constant 0 : index
    %4 = vector.load %arg4[%c0_4, %c0_5] : memref<8x1xf32, #tpu.memory_space<vmem>>, vector<8x1xf32>
    %5 = vector.broadcast %4 : vector<8x1xf32> to vector<8x256xf32>
    %6 = arith.mulf %3, %5 : vector<8x256xf32>
    %c0_6 = arith.constant 0 : index
    %c0_7 = arith.constant 0 : index
    %7 = vector.load %arg5[%c0_6, %c0_7] : memref<8x1xf32, #tpu.memory_space<vmem>>, vector<8x1xf32>
    %8 = vector.broadcast %7 : vector<8x1xf32> to vector<8x256xf32>
    %9 = arith.addf %6, %8 : vector<8x256xf32>
    %c0_8 = arith.constant 0 : index
    %c0_9 = arith.constant 0 : index
    %c0_10 = arith.constant 0 : index
    %10 = vector.load %arg6[%c0_8, %c0_9, %c0_10] : memref<1x8x256xf32, #tpu.memory_space<vmem>>, vector<1x8x256xf32>
    %11 = vector.shape_cast %10 : vector<1x8x256xf32> to vector<8x256xf32>
    %12 = vector.shape_cast %9 : vector<8x256xf32> to vector<1x8x256xf32>
    tpu.vector_store %arg6[%c0_8, %c0_9, %c0_10], %12 {strides = array<i32>} : memref<1x8x256xf32, #tpu.memory_space<vmem>>, vector<1x8x256xf32>,
    return
  }
  func.func @transform_0(%arg0: i32, %arg1: i32) -> (i32, i32, i32) {
    %c0_i32 = arith.constant 0 : i32
    %c0_i32_0 = arith.constant 0 : i32
    return %arg0, %c0_i32, %arg1 : i32, i32, i32
  }
  func.func @transform_1(%arg0: i32, %arg1: i32) -> (i32, i32) {
    %c0_i32 = arith.constant 0 : i32
    %c0_i32_0 = arith.constant 0 : i32
    %c0_i32_1 = arith.constant 0 : i32
    return %c0_i32, %c0_i32_0 : i32, i32
  }
  func.func @transform_2(%arg0: i32, %arg1: i32) -> (i32, i32) {
    %c0_i32 = arith.constant 0 : i32
    %c0_i32_0 = arith.constant 0 : i32
    %c0_i32_1 = arith.constant 0 : i32
    return %c0_i32, %c0_i32_0 : i32, i32
  }
  func.func @transform_3(%arg0: i32, %arg1: i32) -> (i32, i32) {
    %c0_i32 = arith.constant 0 : i32
    %c0_i32_0 = arith.constant 0 : i32
    %c0_i32_1 = arith.constant 0 : i32
    return %c0_i32, %c0_i32_0 : i32, i32
  }
  func.func @transform_4(%arg0: i32, %arg1: i32) -> (i32, i32, i32) {
    %c0_i32 = arith.constant 0 : i32
    %c0_i32_0 = arith.constant 0 : i32
    return %arg0, %c0_i32, %arg1 : i32, i32, i32
  }
}

</mosaic_0001>

<llo_original>
// kernel: conv_bn_forward.3
$region0: #{conv_bn_forward.3}
  #allocation0 [shape = 'u32[]', space=smem, size = 0x4, offset = 0x4, fixed_abs, tag = 'smem constant byte address 0x4 - core index']
  #allocation1 [shape = 'u32[144,128]{1,0:T(1,128)}', space=vmem, size = 0x12000, scoped, tag = 'internal scratch']
  %s0 = inlined_call_operand.vmem [shape: f32[2,4,256], index: 0, kind: input, shape index: {}]
  %s1 = inlined_call_operand.vmem [shape: f32[8,4], index: 1, kind: input, shape index: {}]
  %s2 = inlined_call_operand.vmem [shape: f32[8,1], index: 2, kind: input, shape index: {}]
  %s3 = inlined_call_operand.vmem [shape: f32[8,1], index: 3, kind: input, shape index: {}]
  %s4 = inlined_call_operand.vmem [shape: f32[2,8,256], index: 4, kind: output, shape index: {}]
  %s5 = sld [smem:[#allocation0]]
  $region49: #{conv_bn_forward.3} parent=0
    _
  %s7 = ssub.s32 1, %s5
  %s8 = scalar_select 0, %s7, %s5
  loop: start=0, step=1, limit=4
  $region2: #{conv_bn_forward.3} parent=0 // loop_pre_header
    _
  $region3: #{conv_bn_forward.3} parent=0 // loop_header
    %s10 = sphi 0, %s14
    %p11 = scmp.ge.s32.totalorder %s10, 4
    %s17 = sphi 0, %s29
    %s18 = sphi 0, %s25
    %s19 = sphi 0, %s17
    %s20 = sphi 0, %s18
    %s21 = sphi 0, %s19
    %s22 = sphi 0, %s20
    %s34 = sphi 0, %s36
    %s37 = sphi 0, %s34
    %s38 = sphi 0, %s37
    %s54 = sphi 0, %s38
    %s58 = sphi 0, %s58
    %s60 = sphi 0, %s58
    %s61 = sphi 0, %s60
    %s75 = sphi 0, %s61
    %s79 = sphi 0, %s79
    %s81 = sphi 0, %s79
    %s82 = sphi 0, %s81
    %s96 = sphi 0, %s82
    %s100 = sphi 0, %s100
    %s102 = sphi 0, %s100
    %s103 = sphi 0, %s102
    %s117 = sphi 0, %s103
    %s125 = sphi 0, %s127
    %s128 = sphi 0, %s125
    %s129 = sphi 0, %s128
    %s145 = sphi 0, %s129
  $region4: #{conv_bn_forward.3} parent=0 // loop_header_branch
    %13 = sbr.rel (%p11) target = $region8
  $region5: #{conv_bn_forward.3} parent=0 // loop_body
    %s15 = ssub.s32 %s10, 1
    %s16 = ssub.s32 %s10, 2
    %s23 = sadd.s32 1, %s18
    %p24 = scmp.ge.s32.totalorder %s23, 1
    %s25 = scalar_select %p24, 0, %s23
    %s26 = sadd.s32 1, %s17
    %s27 = scalar_select %p24, %s26, %s17
    %p28 = scmp.ge.s32.totalorder %s27, 2
    %s29 = scalar_select %p28, 0, %s27
    %s30 = ssub.s32 %s17, %s29
    %s31 = ssub.s32 %s18, %s25
    %s32 = sor.u32 %s30, %s31
    %p33 = scmp.eq.s32.totalorder %s32, 0
    %s35 = sadd.s32 %s34, 1
    %s36 = scalar_select %p33, %s34, %s35
    %p39 = pneg %p33
    %p40 = scmp.eq.s32.totalorder %s10, 1
    %p41 = por %p39, %p40
    %p42 = scmp.ne.s32.totalorder %s34, %s37
    %p43 = scmp.eq.s32.totalorder %s10, 0
    %p44 = por %p42, %p43
    %p45 = scmp.ne.s32.totalorder %s34, %s37
    %p46 = scmp.eq.s32.totalorder %s15, 1
    %p47 = por %p45, %p46
    %p48 = scmp.ne.s32.totalorder %s37, %s38
    %p49 = scmp.eq.s32.totalorder %s15, 0
    %p50 = por %p48, %p49
    %p51 = scmp.ne.s32.totalorder %s37, %s38
    %p52 = scmp.eq.s32.totalorder %s16, 1
    %p53 = por %p51, %p52
    %p55 = scmp.ne.s32.totalorder %s38, %s54
    %p56 = scmp.eq.s32.totalorder %s16, 0
    %p57 = por %p55, %p56
    %s59 = sadd.s32 %s58, 1
    %p62 = scmp.eq.s32.totalorder %s10, 1
    %p63 = scmp.ne.s32.totalorder %s58, %s60
    %p64 = scmp.eq.s32.totalorder %s10, 0
    %p65 = por %p63, %p64
    %p66 = scmp.ne.s32.totalorder %s58, %s60
    %p67 = scmp.eq.s32.totalorder %s15, 1
    %p68 = por %p66, %p67
    %p69 = scmp.ne.s32.totalorder %s60, %s61
    %p70 = scmp.eq.s32.totalorder %s15, 0
    %p71 = por %p69, %p70
    %p72 = scmp.ne.s32.totalorder %s60, %s61
    %p73 = scmp.eq.s32.totalorder %s16, 1
    %p74 = por %p72, %p73
    %p76 = scmp.ne.s32.totalorder %s61, %s75
    %p77 = scmp.eq.s32.totalorder %s16, 0
    %p78 = por %p76, %p77
    %s80 = sadd.s32 %s79, 1
    %p83 = scmp.eq.s32.totalorder %s10, 1
    %p84 = scmp.ne.s32.totalorder %s79, %s81
    %p85 = scmp.eq.s32.totalorder %s10, 0
    %p86 = por %p84, %p85
    %p87 = scmp.ne.s32.totalorder %s79, %s81
    %p88 = scmp.eq.s32.totalorder %s15, 1
    %p89 = por %p87, %p88
    %p90 = scmp.ne.s32.totalorder %s81, %s82
    %p91 = scmp.eq.s32.totalorder %s15, 0
    %p92 = por %p90, %p91
    %p93 = scmp.ne.s32.totalorder %s81, %s82
    %p94 = scmp.eq.s32.totalorder %s16, 1
    %p95 = por %p93, %p94
    %p97 = scmp.ne.s32.totalorder %s82, %s96
    %p98 = scmp.eq.s32.totalorder %s16, 0
    %p99 = por %p97, %p98
    %s101 = sadd.s32 %s100, 1
    %p104 = scmp.eq.s32.totalorder %s10, 1
    %p105 = scmp.ne.s32.totalorder %s100, %s102
    %p106 = scmp.eq.s32.totalorder %s10, 0
    %p107 = por %p105, %p106
    %p108 = scmp.ne.s32.totalorder %s100, %s102
    %p109 = scmp.eq.s32.totalorder %s15, 1
    %p110 = por %p108, %p109
    %p111 = scmp.ne.s32.totalorder %s102, %s103
    %p112 = scmp.eq.s32.totalorder %s15, 0
    %p113 = por %p111, %p112
    %p114 = scmp.ne.s32.totalorder %s102, %s103
    %p115 = scmp.eq.s32.totalorder %s16, 1
    %p116 = por %p114, %p115
    %p118 = scmp.ne.s32.totalorder %s103, %s117
    %p119 = scmp.eq.s32.totalorder %s16, 0
    %p120 = por %p118, %p119
    %s121 = ssub.s32 %s17, %s29
    %s122 = ssub.s32 %s18, %s25
    %s123 = sor.u32 %s121, %s122
    %p124 = scmp.eq.s32.totalorder %s123, 0
    %s126 = sadd.s32 %s125, 1
    %s127 = scalar_select %p124, %s125, %s126
    %p130 = pneg %p124
    %p131 = scmp.eq.s32.totalorder %s10, 1
    %p132 = por %p130, %p131
    %p133 = scmp.ne.s32.totalorder %s125, %s128
    %p134 = scmp.eq.s32.totalorder %s10, 0
    %p135 = por %p133, %p134
    %p136 = scmp.ne.s32.totalorder %s125, %s128
    %p137 = scmp.eq.s32.totalorder %s15, 1
    %p138 = por %p136, %p137
    %p139 = scmp.ne.s32.totalorder %s128, %s129
    %p140 = scmp.eq.s32.totalorder %s15, 0
    %p141 = por %p139, %p140
    %p142 = scmp.ne.s32.totalorder %s128, %s129
    %p143 = scmp.eq.s32.totalorder %s16, 1
    %p144 = por %p142, %p143
    %p146 = scmp.ne.s32.totalorder %s129, %s145
    %p147 = scmp.eq.s32.totalorder %s16, 0
    %p148 = por %p146, %p147
    %p149 = scmp.le.s32.totalorder 1, %s10
    %p150 = scmp.lt.s32.totalorder %s10, 3
    %p151 = pnand %p149, %p150
    %p152 = pneg %p151
    // Predicated region
    $region9: #{conv_bn_forward.3} parent=5 // pred_check
      _
    $region10: #{conv_bn_forward.3} parent=5 // pred_check_branch
      %154 = sbr.rel (%p151) target = $region12
    $region11: #{conv_bn_forward.3} parent=5 // pred_region
      %s155 = ssub.s32 %s10, 1
      // Predicated region
      $region13: #{conv_bn_forward.3} parent=11 // pred_check
        %p156 = pneg %p71
      $region14: #{conv_bn_forward.3} parent=11 // pred_check_branch
        %158 = sbr.rel (%p156) target = $region16
      $region15: #{conv_bn_forward.3} parent=11 // pred_region
        _
      $region16: #{conv_bn_forward.3} parent=11 // pred_fallthru
        _
      // Predicated region
      $region17: #{conv_bn_forward.3} parent=11 // pred_check
        %p159 = pneg %p92
      $region18: #{conv_bn_forward.3} parent=11 // pred_check_branch
        %161 = sbr.rel (%p159) target = $region20
      $region19: #{conv_bn_forward.3} parent=11 // pred_region
        _
      $region20: #{conv_bn_forward.3} parent=11 // pred_fallthru
        _
      // Predicated region
      $region21: #{conv_bn_forward.3} parent=11 // pred_check
        %p162 = pneg %p113
      $region22: #{conv_bn_forward.3} parent=11 // pred_check_branch
        %164 = sbr.rel (%p162) target = $region24
      $region23: #{conv_bn_forward.3} parent=11 // pred_region
        _
      $region24: #{conv_bn_forward.3} parent=11 // pred_fallthru
        _
    $region12: #{conv_bn_forward.3} parent=5 // pred_fallthru
      _
    %p165 = scmp.lt.s32.totalorder %s10, 2
    // Predicated region
    $region25: #{conv_bn_forward.3} parent=5 // pred_check
      %p166 = pneg %p165
    $region26: #{conv_bn_forward.3} parent=5 // pred_check_branch
      %168 = sbr.rel (%p166) target = $region28
    $region27: #{conv_bn_forward.3} parent=5 // pred_region
      // Predicated region
      $region29: #{conv_bn_forward.3} parent=27 // pred_check
        %p169 = pneg %p44
      $region30: #{conv_bn_forward.3} parent=27 // pred_check_branch
        %171 = sbr.rel (%p169) target = $region32
      $region31: #{conv_bn_forward.3} parent=27 // pred_region
        %s172 = smul.u32 2, %s18
        %p173 = scmp.lt.s32.totalorder %s17, 1
        %s174 = scalar_select %p173, %s17, 1
        %p175 = scmp.lt.s32.totalorder %s172, 1
        %s176 = scalar_select %p175, %s172, 1
        %s177 = smul.addr %s174, 2
        %s178 = sadd.s32 %s176, %s177
        %s179 = smul.addr %s178, 4
        %s180 = scalar_lea.vmem %s0, %s179
        %s181 = smul.u32 2, %s18
      $region32: #{conv_bn_forward.3} parent=27 // pred_fallthru
        _
    $region28: #{conv_bn_forward.3} parent=5 // pred_fallthru
      _
    %p182 = scmp.le.s32.totalorder 1, %s10
    %p183 = scmp.lt.s32.totalorder %s10, 3
    %p184 = pnand %p182, %p183
    %p185 = pneg %p184
    // Predicated region
    $region33: #{conv_bn_forward.3} parent=5 // pred_check
      _
    $region34: #{conv_bn_forward.3} parent=5 // pred_check_branch
      %187 = sbr.rel (%p184) target = $region36
    $region35: #{conv_bn_forward.3} parent=5 // pred_region
      %s188 = ssub.s32 %s10, 1
      %s189 = smul.u32 2, %s20
      %p190 = scmp.lt.s32.totalorder %s19, 1
      %s191 = scalar_select %p190, %s19, 1
      %p192 = scmp.lt.s32.totalorder %s189, 1
      %s193 = scalar_select %p192, %s189, 1
      %s194 = smul.addr %s191, 2
      %s195 = sadd.s32 %s193, %s194
      %s196 = smul.addr %s195, 4
      %s197 = scalar_lea.vmem %s0, %s196
      %p198 = pneg %p50
      %p199 = pneg %p47
      %p200 = pneg %p71
      %p201 = pneg %p68
      %p202 = pneg %p92
      %p203 = pneg %p89
      %p204 = pneg %p113
      %p205 = pneg %p110
      %p206 = pneg %p141
      %p207 = pneg %p138
      %s208 = smul.u32 2, %s20
      %p209 = scmp.lt.s32.totalorder %s19, 1
      %s210 = scalar_select %p209, %s19, 1
      %p211 = scmp.lt.s32.totalorder %s208, 1
      %s212 = scalar_select %p211, %s208, 1
      %s213 = smul.addr %s210, 2
      %s214 = sadd.s32 %s212, %s213
      %s215 = smul.addr %s214, 8
      %s216 = scalar_lea.vmem %s4, %s215
      %s217 = smul.u32 2, %s20
      %p218 = scmp.lt.s32.totalorder %s19, 1
      %s219 = scalar_select %p218, %s19, 1
      %p220 = scmp.lt.s32.totalorder %s217, 1
      %s221 = scalar_select %p220, %s217, 1
      %s222 = smul.addr %s219, 2
      %s223 = sadd.s32 %s221, %s222
      %s224 = smul.addr %s223, 4
      %s225 = scalar_lea.vmem %s0, %s224
      %s226 = smul.u32 2, %s20
      %s227 = smul.u32 2, %s20
      %p228 = scmp.lt.s32.totalorder %s19, 1
      %s229 = scalar_select %p228, %s19, 1
      %p230 = scmp.lt.s32.totalorder %s227, 1
      %s231 = scalar_select %p230, %s227, 1
      %s232 = smul.addr %s229, 2
      %s233 = sadd.s32 %s231, %s232
      %s234 = smul.addr %s233, 8
      %s235 = scalar_lea.vmem %s4, %s234
      %s236 = smul.u32 2, %s20
      %v237 = vld [vmem:[%s1] sm:$0xff]
      %v238 = vld [vmem:[%s225] sm:$0xff]
      %v240 = vcombine.high %v238, %v238
      %vm241 = vcmask 31744
      %v243 = vsel %vm241, %v237, 0
      %vm245 = vcmask 1043456
      %v246 = vsel %vm245, %v238, 0
      %v248 = vsel %vm245, %v240, 0
      %250 = vmatprep.subr.mxu0 %v248
      %251 = vmatpush1.msra.mxu0 %v246
      %252 = vmatprep.subr.mxu0 0.0
      %253 = vmatpush1.msra.mxu0 0.0
      %254 = vmatprep.subr.mxu0 0.0
      %255 = vmatpush1.msra.mxu0 0.0
      %256 = vmatprep.subr.mxu0 0.0
      %257 = vmatpush1.msra.mxu0 0.0
      %258 = vmatprep.subr.mxu0 0.0
      %259 = vmatpush1.msra.mxu0 0.0
      %260 = vmatprep.subr.mxu0 0.0
      %261 = vmatpush1.msra.mxu0 0.0
      %262 = vmatprep.subr.mxu0 0.0
      %263 = vmatpush1.msra.mxu0 0.0
      %264 = vmatprep.subr.mxu0 0.0
      %265 = vmatpush1.msra.mxu0 0.0
      %266 = vmatprep.subr.mxu0 0.0
      %267 = vmatpush1.msra.mxu0 0.0
      %268 = vmatprep.subr.mxu0 0.0
      %269 = vmatpush1.msra.mxu0 0.0
      %270 = vmatprep.subr.mxu0 0.0
      %271 = vmatpush1.msra.mxu0 0.0
      %272 = vmatprep.subr.mxu0 0.0
      %273 = vmatpush1.msra.mxu0 0.0
      %274 = vmatprep.subr.mxu0 0.0
      %275 = vmatpush1.msra.mxu0 0.0
      %276 = vmatprep.subr.mxu0 0.0
      %277 = vmatpush1.msra.mxu0 0.0
      %278 = vmatprep.subr.mxu0 0.0
      %279 = vmatpush1.msra.mxu0 0.0
      %280 = vmatprep.subr.mxu0 0.0
      %281 = vmatpush1.msra.mxu0 0.0
      %282 = vmatprep.subr.mxu0 0.0
      %283 = vmatpush1.msra.mxu0 0.0
      %284 = vmatprep.subr.mxu0 0.0
      %285 = vmatpush1.msra.mxu0 0.0
      %286 = vmatprep.subr.mxu0 0.0
      %287 = vmatpush1.msra.mxu0 0.0
      %288 = vmatprep.subr.mxu0 0.0
      %289 = vmatpush1.msra.mxu0 0.0
      %290 = vmatprep.subr.mxu0 0.0
      %291 = vmatpush1.msra.mxu0 0.0
      %292 = vmatprep.subr.mxu0 0.0
      %293 = vmatpush1.msra.mxu0 0.0
      %294 = vmatprep.subr.mxu0 0.0
      %295 = vmatpush1.msra.mxu0 0.0
      %296 = vmatprep.subr.mxu0 0.0
      %297 = vmatpush1.msra.mxu0 0.0
      %298 = vmatprep.subr.mxu0 0.0
      %299 = vmatpush1.msra.mxu0 0.0
      %300 = vmatprep.subr.mxu0 0.0
      %301 = vmatpush1.msra.mxu0 0.0
      %302 = vmatprep.subr.mxu0 0.0
      %303 = vmatpush1.msra.mxu0 0.0
      %304 = vmatprep.subr.mxu0 0.0
      %305 = vmatpush1.msra.mxu0 0.0
      %306 = vmatprep.subr.mxu0 0.0
      %307 = vmatpush1.msra.mxu0 0.0
      %308 = vmatprep.subr.mxu0 0.0
      %309 = vmatpush1.msra.mxu0 0.0
      %310 = vmatprep.subr.mxu0 0.0
      %311 = vmatpush1.msra.mxu0 0.0
      %312 = vmatprep.subr.mxu0 0.0
      %313 = vmatpush1.msra.mxu0 0.0
      %314 = vmatprep.mubr.f32.mxu0 0.0
      %315 = vmatmul.mubr.f32.gmra.mrb[0].mxu0 %v243
      %v316 = vpop.f32.mrb[0].mxu0
      %v317 = vadd.f32 0.0, %v316
      %v318 = vpop.f32.mrb[0].mxu0
      %v319 = vadd.f32 0.0, %v318
      %320 = vdwg.mxu0
      %v321 = vld [vmem:[%s2] sm:$0xff]
      %323 = vset.pattern.permute.xlu0 0
      %324 = vperm.xlu0 %323, %v321
      %v325 = vpop.permute.xlu0 %324
      %v327 = vmul.f32 %v317, %v325
      %v328 = vmul.f32 %v319, %v325
      %v329 = vld [vmem:[%s3] sm:$0xff]
      %331 = vset.pattern.permute.xlu0 0
      %332 = vperm.xlu0 %331, %v329
      %v333 = vpop.permute.xlu0 %332
      %v335 = vadd.f32 %v327, %v333
      %v336 = vadd.f32 %v328, %v333
      %337 = vst [vmem:[%s235] sm:$0xff] %v335
      %338 = vst [vmem:[%s235 + $0x8] sm:$0xff] %v336
      %s339 = smul.u32 2, %s20
      %p340 = scmp.lt.s32.totalorder %s19, 1
      %s341 = scalar_select %p340, %s19, 1
      %p342 = scmp.lt.s32.totalorder %s339, 1
      %s343 = scalar_select %p342, %s339, 1
      %s344 = smul.addr %s341, 2
      %s345 = sadd.s32 %s343, %s344
      %s346 = smul.addr %s345, 8
      %s347 = scalar_lea.vmem %s4, %s346
      // Predicated region
      $region37: #{conv_bn_forward.3} parent=35 // pred_check
        %p348 = pneg %p138
      $region38: #{conv_bn_forward.3} parent=35 // pred_check_branch
        %350 = sbr.rel (%p348) target = $region40
      $region39: #{conv_bn_forward.3} parent=35 // pred_region
        %s351 = smul.u32 2, %s20
      $region40: #{conv_bn_forward.3} parent=35 // pred_fallthru
        _
    $region36: #{conv_bn_forward.3} parent=5 // pred_fallthru
      _
    %p352 = scmp.le.s32.totalorder 2, %s10
    // Predicated region
    $region41: #{conv_bn_forward.3} parent=5 // pred_check
      %p353 = pneg %p352
    $region42: #{conv_bn_forward.3} parent=5 // pred_check_branch
      %355 = sbr.rel (%p353) target = $region44
    $region43: #{conv_bn_forward.3} parent=5 // pred_region
      %s356 = ssub.s32 %s10, 2
      // Predicated region
      $region45: #{conv_bn_forward.3} parent=43 // pred_check
        %p357 = pneg %p144
      $region46: #{conv_bn_forward.3} parent=43 // pred_check_branch
        %359 = sbr.rel (%p357) target = $region48
      $region47: #{conv_bn_forward.3} parent=43 // pred_region
        %s360 = smul.u32 2, %s22
        %p361 = scmp.lt.s32.totalorder %s21, 1
        %s362 = scalar_select %p361, %s21, 1
        %p363 = scmp.lt.s32.totalorder %s360, 1
        %s364 = scalar_select %p363, %s360, 1
        %s365 = smul.addr %s362, 2
        %s366 = sadd.s32 %s364, %s365
        %s367 = smul.addr %s366, 8
        %s368 = scalar_lea.vmem %s4, %s367
      $region48: #{conv_bn_forward.3} parent=43 // pred_fallthru
        _
    $region44: #{conv_bn_forward.3} parent=5 // pred_fallthru
      _
  $region6: #{conv_bn_forward.3} parent=0 // loop_footer
    %s14 = sadd.s32 1, %s10
  $region7: #{conv_bn_forward.3} parent=0 // loop_footer_branch
    %9 = sbr.rel target = $region3
  $region8: #{conv_bn_forward.3} parent=0 // loop_exit
    _

// kernel: conv_bn_forward.2
$region0: #{conv_bn_forward.2}
  #allocation0 [shape = 'u32[]', space=smem, size = 0x4, offset = 0x4, fixed_abs, tag = 'smem constant byte address 0x4 - core index']
  #allocation1 [shape = 'u32[144,128]{1,0:T(1,128)}', space=vmem, size = 0x12000, scoped, tag = 'internal scratch']
  %s0 = inlined_call_operand.vmem [shape: f32[2,4,256], index: 0, kind: input, shape index: {}]
  %s1 = inlined_call_operand.vmem [shape: f32[8,4], index: 1, kind: input, shape index: {}]
  %s2 = inlined_call_operand.vmem [shape: f32[2,8,1], index: 2, kind: output, shape index: {0}]
  %s3 = inlined_call_operand.vmem [shape: f32[2,8,1], index: 3, kind: output, shape index: {1}]
  %4 = xla_tuple %s2, %s3
  %s5 = sld [smem:[#allocation0]]
  $region53: #{conv_bn_forward.2} parent=0
    _
  %s7 = ssub.s32 1, %s5
  %s8 = scalar_select 0, %s7, %s5
  loop: start=0, step=1, limit=4
  $region2: #{conv_bn_forward.2} parent=0 // loop_pre_header
    _
  $region3: #{conv_bn_forward.2} parent=0 // loop_header
    %s10 = sphi 0, %s14
    %p11 = scmp.ge.s32.totalorder %s10, 4
    %s17 = sphi 0, %s29
    %s18 = sphi 0, %s25
    %s19 = sphi 0, %s17
    %s20 = sphi 0, %s18
    %s21 = sphi 0, %s19
    %s22 = sphi 0, %s20
    %s34 = sphi 0, %s36
    %s37 = sphi 0, %s34
    %s38 = sphi 0, %s37
    %s54 = sphi 0, %s38
    %s58 = sphi 0, %s58
    %s60 = sphi 0, %s58
    %s61 = sphi 0, %s60
    %s75 = sphi 0, %s61
    %s81 = sphi 0, %s83
    %s84 = sphi 0, %s81
    %s85 = sphi 0, %s84
    %s101 = sphi 0, %s85
    %s107 = sphi 0, %s109
    %s110 = sphi 0, %s107
    %s111 = sphi 0, %s110
    %s127 = sphi 0, %s111
  $region4: #{conv_bn_forward.2} parent=0 // loop_header_branch
    %13 = sbr.rel (%p11) target = $region8
  $region5: #{conv_bn_forward.2} parent=0 // loop_body
    %s15 = ssub.s32 %s10, 1
    %s16 = ssub.s32 %s10, 2
    %s23 = sadd.s32 1, %s18
    %p24 = scmp.ge.s32.totalorder %s23, 1
    %s25 = scalar_select %p24, 0, %s23
    %s26 = sadd.s32 1, %s17
    %s27 = scalar_select %p24, %s26, %s17
    %p28 = scmp.ge.s32.totalorder %s27, 2
    %s29 = scalar_select %p28, 0, %s27
    %s30 = ssub.s32 %s17, %s29
    %s31 = ssub.s32 %s18, %s25
    %s32 = sor.u32 %s30, %s31
    %p33 = scmp.eq.s32.totalorder %s32, 0
    %s35 = sadd.s32 %s34, 1
    %s36 = scalar_select %p33, %s34, %s35
    %p39 = pneg %p33
    %p40 = scmp.eq.s32.totalorder %s10, 1
    %p41 = por %p39, %p40
    %p42 = scmp.ne.s32.totalorder %s34, %s37
    %p43 = scmp.eq.s32.totalorder %s10, 0
    %p44 = por %p42, %p43
    %p45 = scmp.ne.s32.totalorder %s34, %s37
    %p46 = scmp.eq.s32.totalorder %s15, 1
    %p47 = por %p45, %p46
    %p48 = scmp.ne.s32.totalorder %s37, %s38
    %p49 = scmp.eq.s32.totalorder %s15, 0
    %p50 = por %p48, %p49
    %p51 = scmp.ne.s32.totalorder %s37, %s38
    %p52 = scmp.eq.s32.totalorder %s16, 1
    %p53 = por %p51, %p52
    %p55 = scmp.ne.s32.totalorder %s38, %s54
    %p56 = scmp.eq.s32.totalorder %s16, 0
    %p57 = por %p55, %p56
    %s59 = sadd.s32 %s58, 1
    %p62 = scmp.eq.s32.totalorder %s10, 1
    %p63 = scmp.ne.s32.totalorder %s58, %s60
    %p64 = scmp.eq.s32.totalorder %s10, 0
    %p65 = por %p63, %p64
    %p66 = scmp.ne.s32.totalorder %s58, %s60
    %p67 = scmp.eq.s32.totalorder %s15, 1
    %p68 = por %p66, %p67
    %p69 = scmp.ne.s32.totalorder %s60, %s61
    %p70 = scmp.eq.s32.totalorder %s15, 0
    %p71 = por %p69, %p70
    %p72 = scmp.ne.s32.totalorder %s60, %s61
    %p73 = scmp.eq.s32.totalorder %s16, 1
    %p74 = por %p72, %p73
    %p76 = scmp.ne.s32.totalorder %s61, %s75
    %p77 = scmp.eq.s32.totalorder %s16, 0
    %p78 = por %p76, %p77
    %s79 = ssub.s32 %s17, %s29
    %p80 = scmp.eq.s32.totalorder %s79, 0
    %s82 = sadd.s32 %s81, 1
    %s83 = scalar_select %p80, %s81, %s82
    %p86 = pneg %p80
    %p87 = scmp.eq.s32.totalorder %s10, 1
    %p88 = por %p86, %p87
    %p89 = scmp.ne.s32.totalorder %s81, %s84
    %p90 = scmp.eq.s32.totalorder %s10, 0
    %p91 = por %p89, %p90
    %p92 = scmp.ne.s32.totalorder %s81, %s84
    %p93 = scmp.eq.s32.totalorder %s15, 1
    %p94 = por %p92, %p93
    %p95 = scmp.ne.s32.totalorder %s84, %s85
    %p96 = scmp.eq.s32.totalorder %s15, 0
    %p97 = por %p95, %p96
    %p98 = scmp.ne.s32.totalorder %s84, %s85
    %p99 = scmp.eq.s32.totalorder %s16, 1
    %p100 = por %p98, %p99
    %p102 = scmp.ne.s32.totalorder %s85, %s101
    %p103 = scmp.eq.s32.totalorder %s16, 0
    %p104 = por %p102, %p103
    %s105 = ssub.s32 %s17, %s29
    %p106 = scmp.eq.s32.totalorder %s105, 0
    %s108 = sadd.s32 %s107, 1
    %s109 = scalar_select %p106, %s107, %s108
    %p112 = pneg %p106
    %p113 = scmp.eq.s32.totalorder %s10, 1
    %p114 = por %p112, %p113
    %p115 = scmp.ne.s32.totalorder %s107, %s110
    %p116 = scmp.eq.s32.totalorder %s10, 0
    %p117 = por %p115, %p116
    %p118 = scmp.ne.s32.totalorder %s107, %s110
    %p119 = scmp.eq.s32.totalorder %s15, 1
    %p120 = por %p118, %p119
    %p121 = scmp.ne.s32.totalorder %s110, %s111
    %p122 = scmp.eq.s32.totalorder %s15, 0
    %p123 = por %p121, %p122
    %p124 = scmp.ne.s32.totalorder %s110, %s111
    %p125 = scmp.eq.s32.totalorder %s16, 1
    %p126 = por %p124, %p125
    %p128 = scmp.ne.s32.totalorder %s111, %s127
    %p129 = scmp.eq.s32.totalorder %s16, 0
    %p130 = por %p128, %p129
    %p131 = scmp.le.s32.totalorder 1, %s10
    %p132 = scmp.lt.s32.totalorder %s10, 3
    %p133 = pnand %p131, %p132
    %p134 = pneg %p133
    // Predicated region
    $region9: #{conv_bn_forward.2} parent=5 // pred_check
      _
    $region10: #{conv_bn_forward.2} parent=5 // pred_check_branch
      %136 = sbr.rel (%p133) target = $region12
    $region11: #{conv_bn_forward.2} parent=5 // pred_region
      %s137 = ssub.s32 %s10, 1
      // Predicated region
      $region13: #{conv_bn_forward.2} parent=11 // pred_check
        %p138 = pneg %p71
      $region14: #{conv_bn_forward.2} parent=11 // pred_check_branch
        %140 = sbr.rel (%p138) target = $region16
      $region15: #{conv_bn_forward.2} parent=11 // pred_region
        _
      $region16: #{conv_bn_forward.2} parent=11 // pred_fallthru
        _
    $region12: #{conv_bn_forward.2} parent=5 // pred_fallthru
      _
    %p141 = scmp.lt.s32.totalorder %s10, 2
    // Predicated region
    $region17: #{conv_bn_forward.2} parent=5 // pred_check
      %p142 = pneg %p141
    $region18: #{conv_bn_forward.2} parent=5 // pred_check_branch
      %144 = sbr.rel (%p142) target = $region20
    $region19: #{conv_bn_forward.2} parent=5 // pred_region
      // Predicated region
      $region21: #{conv_bn_forward.2} parent=19 // pred_check
        %p145 = pneg %p44
      $region22: #{conv_bn_forward.2} parent=19 // pred_check_branch
        %147 = sbr.rel (%p145) target = $region24
      $region23: #{conv_bn_forward.2} parent=19 // pred_region
        %s148 = smul.u32 2, %s18
        %p149 = scmp.lt.s32.totalorder %s17, 1
        %s150 = scalar_select %p149, %s17, 1
        %p151 = scmp.lt.s32.totalorder %s148, 1
        %s152 = scalar_select %p151, %s148, 1
        %s153 = smul.addr %s150, 2
        %s154 = sadd.s32 %s152, %s153
        %s155 = smul.addr %s154, 4
        %s156 = scalar_lea.vmem %s0, %s155
        %s157 = smul.u32 2, %s18
      $region24: #{conv_bn_forward.2} parent=19 // pred_fallthru
        _
    $region20: #{conv_bn_forward.2} parent=5 // pred_fallthru
      _
    %p158 = scmp.le.s32.totalorder 1, %s10
    %p159 = scmp.lt.s32.totalorder %s10, 3
    %p160 = pnand %p158, %p159
    %p161 = pneg %p160
    // Predicated region
    $region25: #{conv_bn_forward.2} parent=5 // pred_check
      _
    $region26: #{conv_bn_forward.2} parent=5 // pred_check_branch
      %163 = sbr.rel (%p160) target = $region28
    $region27: #{conv_bn_forward.2} parent=5 // pred_region
      %s164 = ssub.s32 %s10, 1
      %s165 = smul.u32 2, %s20
      %p166 = scmp.lt.s32.totalorder %s19, 1
      %s167 = scalar_select %p166, %s19, 1
      %p168 = scmp.lt.s32.totalorder %s165, 1
      %s169 = scalar_select %p168, %s165, 1
      %s170 = smul.addr %s167, 2
      %s171 = sadd.s32 %s169, %s170
      %s172 = smul.addr %s171, 4
      %s173 = scalar_lea.vmem %s0, %s172
      %p174 = pneg %p50
      %p175 = pneg %p47
      %p176 = pneg %p71
      %p177 = pneg %p68
      %p178 = pneg %p97
      %p179 = pneg %p94
      %p180 = scmp.lt.s32.totalorder %s19, 1
      %s181 = scalar_select %p180, %s19, 1
      %s182 = smul.addr %s181, 8
      %s183 = scalar_lea.vmem %s2, %s182
      %p184 = pneg %p123
      %p185 = pneg %p120
      %p186 = scmp.lt.s32.totalorder %s19, 1
      %s187 = scalar_select %p186, %s19, 1
      %s188 = smul.addr %s187, 8
      %s189 = scalar_lea.vmem %s3, %s188
      %s190 = smul.u32 2, %s20
      %p191 = scmp.lt.s32.totalorder %s19, 1
      %s192 = scalar_select %p191, %s19, 1
      %p193 = scmp.lt.s32.totalorder %s190, 1
      %s194 = scalar_select %p193, %s190, 1
      %s195 = smul.addr %s192, 2
      %s196 = sadd.s32 %s194, %s195
      %s197 = smul.addr %s196, 4
      %s198 = scalar_lea.vmem %s0, %s197
      %s199 = smul.u32 2, %s20
      %p200 = scmp.lt.s32.totalorder %s19, 1
      %s201 = scalar_select %p200, %s19, 1
      %s202 = smul.addr %s201, 8
      %s203 = scalar_lea.vmem %s2, %s202
      %p204 = scmp.lt.s32.totalorder %s19, 1
      %s205 = scalar_select %p204, %s19, 1
      %s206 = smul.addr %s205, 8
      %s207 = scalar_lea.vmem %s3, %s206
      %p208 = scmp.eq.s32.totalorder %s20, 0
      // Predicated region
      $region29: #{conv_bn_forward.2} parent=27 // pred_check
        %p209 = pneg %p208
      $region30: #{conv_bn_forward.2} parent=27 // pred_check_branch
        %211 = sbr.rel (%p209) target = $region32
      $region31: #{conv_bn_forward.2} parent=27 // pred_region
        %vm212 = vcmask 7168
        %213 = vst.msk [vmem:[%s203] sm:$0xff] %vm212, 0.0
        %214 = vst.msk [vmem:[%s207] sm:$0xff] %vm212, 0.0
      $region32: #{conv_bn_forward.2} parent=27 // pred_fallthru
        _
      %v215 = vld [vmem:[%s1] sm:$0xff]
      %v216 = vld [vmem:[%s198] sm:$0xff]
      %v218 = vcombine.high %v216, %v216
      %vm219 = vcmask 31744
      %v221 = vsel %vm219, %v215, 0
      %vm223 = vcmask 1043456
      %v224 = vsel %vm223, %v216, 0
      %v226 = vsel %vm223, %v218, 0
      %228 = vmatprep.subr.mxu0 %v226
      %229 = vmatpush1.msra.mxu0 %v224
      %230 = vmatprep.subr.mxu0 0.0
      %231 = vmatpush1.msra.mxu0 0.0
      %232 = vmatprep.subr.mxu0 0.0
      %233 = vmatpush1.msra.mxu0 0.0
      %234 = vmatprep.subr.mxu0 0.0
      %235 = vmatpush1.msra.mxu0 0.0
      %236 = vmatprep.subr.mxu0 0.0
      %237 = vmatpush1.msra.mxu0 0.0
      %238 = vmatprep.subr.mxu0 0.0
      %239 = vmatpush1.msra.mxu0 0.0
      %240 = vmatprep.subr.mxu0 0.0
      %241 = vmatpush1.msra.mxu0 0.0
      %242 = vmatprep.subr.mxu0 0.0
      %243 = vmatpush1.msra.mxu0 0.0
      %244 = vmatprep.subr.mxu0 0.0
      %245 = vmatpush1.msra.mxu0 0.0
      %246 = vmatprep.subr.mxu0 0.0
      %247 = vmatpush1.msra.mxu0 0.0
      %248 = vmatprep.subr.mxu0 0.0
      %249 = vmatpush1.msra.mxu0 0.0
      %250 = vmatprep.subr.mxu0 0.0
      %251 = vmatpush1.msra.mxu0 0.0
      %252 = vmatprep.subr.mxu0 0.0
      %253 = vmatpush1.msra.mxu0 0.0
      %254 = vmatprep.subr.mxu0 0.0
      %255 = vmatpush1.msra.mxu0 0.0
      %256 = vmatprep.subr.mxu0 0.0
      %257 = vmatpush1.msra.mxu0 0.0
      %258 = vmatprep.subr.mxu0 0.0
      %259 = vmatpush1.msra.mxu0 0.0
      %260 = vmatprep.subr.mxu0 0.0
      %261 = vmatpush1.msra.mxu0 0.0
      %262 = vmatprep.subr.mxu0 0.0
      %263 = vmatpush1.msra.mxu0 0.0
      %264 = vmatprep.subr.mxu0 0.0
      %265 = vmatpush1.msra.mxu0 0.0
      %266 = vmatprep.subr.mxu0 0.0
      %267 = vmatpush1.msra.mxu0 0.0
      %268 = vmatprep.subr.mxu0 0.0
      %269 = vmatpush1.msra.mxu0 0.0
      %270 = vmatprep.subr.mxu0 0.0
      %271 = vmatpush1.msra.mxu0 0.0
      %272 = vmatprep.subr.mxu0 0.0
      %273 = vmatpush1.msra.mxu0 0.0
      %274 = vmatprep.subr.mxu0 0.0
      %275 = vmatpush1.msra.mxu0 0.0
      %276 = vmatprep.subr.mxu0 0.0
      %277 = vmatpush1.msra.mxu0 0.0
      %278 = vmatprep.subr.mxu0 0.0
      %279 = vmatpush1.msra.mxu0 0.0
      %280 = vmatprep.subr.mxu0 0.0
      %281 = vmatpush1.msra.mxu0 0.0
      %282 = vmatprep.subr.mxu0 0.0
      %283 = vmatpush1.msra.mxu0 0.0
      %284 = vmatprep.subr.mxu0 0.0
      %285 = vmatpush1.msra.mxu0 0.0
      %286 = vmatprep.subr.mxu0 0.0
      %287 = vmatpush1.msra.mxu0 0.0
      %288 = vmatprep.subr.mxu0 0.0
      %289 = vmatpush1.msra.mxu0 0.0
      %290 = vmatprep.subr.mxu0 0.0
      %291 = vmatpush1.msra.mxu0 0.0
      %292 = vmatprep.mubr.f32.mxu0 0.0
      %293 = vmatmul.mubr.f32.gmra.mrb[0].mxu0 %v221
      %v294 = vpop.f32.mrb[0].mxu0
      %v295 = vadd.f32 0.0, %v294
      %v296 = vpop.f32.mrb[0].mxu0
      %v297 = vadd.f32 0.0, %v296
      %298 = vdwg.mxu0
      %v299 = vadd.f32 %v295, %v297
      %300 = vadd.xlane.f32.xlu0 %v299
      %v301 = vpop.xlane.xlu0 %300
      %v302 = vmul.f32 %v295, %v295
      %v303 = vmul.f32 %v297, %v297
      %v304 = vadd.f32 %v302, %v303
      %305 = vadd.xlane.f32.xlu0 %v304
      %v306 = vpop.xlane.xlu0 %305
      %v307 = vld [vmem:[%s203] sm:$0xff]
      %v308 = vadd.f32 %v307, %v301
      %vm309 = vcmask 7168
      %310 = vst.msk [vmem:[%s203] sm:$0xff] %vm309, %v308
      %v311 = vld [vmem:[%s207] sm:$0xff]
      %v312 = vadd.f32 %v311, %v306
      %313 = vst.msk [vmem:[%s207] sm:$0xff] %vm309, %v312
      %p314 = scmp.lt.s32.totalorder %s19, 1
      %s315 = scalar_select %p314, %s19, 1
      %s316 = smul.addr %s315, 8
      %s317 = scalar_lea.vmem %s2, %s316
      %p318 = scmp.lt.s32.totalorder %s19, 1
      %s319 = scalar_select %p318, %s19, 1
      %s320 = smul.addr %s319, 8
      %s321 = scalar_lea.vmem %s3, %s320
      // Predicated region
      $region33: #{conv_bn_forward.2} parent=27 // pred_check
        %p322 = pneg %p94
      $region34: #{conv_bn_forward.2} parent=27 // pred_check_branch
        %324 = sbr.rel (%p322) target = $region36
      $region35: #{conv_bn_forward.2} parent=27 // pred_region
        _
      $region36: #{conv_bn_forward.2} parent=27 // pred_fallthru
        _
      // Predicated region
      $region37: #{conv_bn_forward.2} parent=27 // pred_check
        %p325 = pneg %p120
      $region38: #{conv_bn_forward.2} parent=27 // pred_check_branch
        %327 = sbr.rel (%p325) target = $region40
      $region39: #{conv_bn_forward.2} parent=27 // pred_region
        _
      $region40: #{conv_bn_forward.2} parent=27 // pred_fallthru
        _
    $region28: #{conv_bn_forward.2} parent=5 // pred_fallthru
      _
    %p328 = scmp.le.s32.totalorder 2, %s10
    // Predicated region
    $region41: #{conv_bn_forward.2} parent=5 // pred_check
      %p329 = pneg %p328
    $region42: #{conv_bn_forward.2} parent=5 // pred_check_branch
      %331 = sbr.rel (%p329) target = $region44
    $region43: #{conv_bn_forward.2} parent=5 // pred_region
      %s332 = ssub.s32 %s10, 2
      // Predicated region
      $region45: #{conv_bn_forward.2} parent=43 // pred_check
        %p333 = pneg %p100
      $region46: #{conv_bn_forward.2} parent=43 // pred_check_branch
        %335 = sbr.rel (%p333) target = $region48
      $region47: #{conv_bn_forward.2} parent=43 // pred_region
        %p336 = scmp.lt.s32.totalorder %s21, 1
        %s337 = scalar_select %p336, %s21, 1
        %s338 = smul.addr %s337, 8
        %s339 = scalar_lea.vmem %s2, %s338
      $region48: #{conv_bn_forward.2} parent=43 // pred_fallthru
        _
      // Predicated region
      $region49: #{conv_bn_forward.2} parent=43 // pred_check
        %p340 = pneg %p126
      $region50: #{conv_bn_forward.2} parent=43 // pred_check_branch
        %342 = sbr.rel (%p340) target = $region52
      $region51: #{conv_bn_forward.2} parent=43 // pred_region
        %p343 = scmp.lt.s32.totalorder %s21, 1
        %s344 = scalar_select %p343, %s21, 1
        %s345 = smul.addr %s344, 8
        %s346 = scalar_lea.vmem %s3, %s345
      $region52: #{conv_bn_forward.2} parent=43 // pred_fallthru
        _
    $region44: #{conv_bn_forward.2} parent=5 // pred_fallthru
      _
  $region6: #{conv_bn_forward.2} parent=0 // loop_footer
    %s14 = sadd.s32 1, %s10
  $region7: #{conv_bn_forward.2} parent=0 // loop_footer_branch
    %9 = sbr.rel target = $region3
  $region8: #{conv_bn_forward.2} parent=0 // loop_exit
    _

</llo_original>
